<compile_context>
chip_gen: v7x
topology: tpu7x:2x2x1
jax: 0.10.0
libtpu: 0.0.40
codegen_flags: <defaults>
</compile_context>

<pallas_src>
import functools

import jax
import jax.numpy as jnp
import numpy as np
from jax.experimental import pallas as pl
from jax.experimental.pallas import tpu as pltpu


def _round_up(a, b):
    return ((a + b - 1) // b) * b


@functools.lru_cache(maxsize=None)
def _vmem_limit_bytes():
    """Per-generation VMEM limit: ~3/4 of physical, capped at 100 MiB.
    v5e/v6e (128 MiB) -> 96 MiB;  v7x (64 MiB per TC) -> 48 MiB."""
    try:
        info = pltpu.get_tpu_info()
        cap = int(getattr(info, "vmem_capacity_bytes", 64 * 1024 * 1024))
    except Exception:  # be robust if the query is unavailable
        cap = 64 * 1024 * 1024
    return int(min(100 * 1024 * 1024, cap * 3 // 4))


def _choose_tk(k, n2p, w_isz, budget):
    """K tile for the fallback path: double-buffered resident weight should use
    at most ~1/3 of the budget; prefer a tk that divides K (skips the edge mask)."""
    tk_max = (budget // 3) // max(2 * n2p * w_isz, 1)
    tk_max = max(128, min(_round_up(k, 128), (tk_max // 128) * 128))
    tk = tk_max
    while tk >= 128:
        if k % tk == 0:
            return tk
        tk -= 128
    return tk_max


# ----------------------------- kernels ------------------------------------- #


def _fused_kernel(x_ref, w_ref, b_ref, o_ref):
    # x_ref: (tm, K)  w_ref: (K, N2p)  b_ref: (1, N2p) f32  o_ref: (tm, N2p)
    xv = x_ref[...]
    if xv.dtype != jnp.float32 and xv.dtype != jnp.bfloat16:
        xv = xv.astype(jnp.float32)  # per-tile VPU cast, hidden under the DMA
    acc = jnp.dot(xv, w_ref[...], preferred_element_type=jnp.float32)
    o_ref[...] = (acc + b_ref[...]).astype(o_ref.dtype)


def _make_ktiled_kernel(k_actual, tk, needs_mask):
    """K-tiled fallback: accumulate partial matmuls in an f32 scratch; add the
    bias and cast on the last K step. When K was padded to a multiple of tk,
    the (garbage) out-of-range x columns of the last K tile are masked to zero
    (the padded weight rows are already zero)."""

    def kernel(x_ref, w_ref, b_ref, o_ref, acc_ref):
        k = pl.program_id(1)

        @pl.when(k == 0)
        def _init():
            acc_ref[...] = jnp.zeros_like(acc_ref)

        xv = x_ref[...]
        if xv.dtype != jnp.float32 and xv.dtype != jnp.bfloat16:
            xv = xv.astype(jnp.float32)
        if needs_mask:
            col = jax.lax.broadcasted_iota(jnp.int32, xv.shape, 1) + k * tk
            xv = jnp.where(col < k_actual, xv, jnp.zeros_like(xv))
        acc_ref[...] += jnp.dot(xv, w_ref[...], preferred_element_type=jnp.float32)

        @pl.when(k == pl.num_programs(1) - 1)
        def _store():
            o_ref[...] = (acc_ref[...] + b_ref[...]).astype(o_ref.dtype)

    return kernel


# ------------------------ one-time weight preparation ----------------------- #


def make_cls_fea_hv_params(w_h, b_h, w_v, b_v, depth, height, width,
                           x_dtype=jnp.float32):
    """Build the combined, pre-scaled, pre-transposed, lane-dense-padded weight
    slab ONCE per weight set / input geometry (hoisted out of the hot path).

    Returns (w_comb [K, N2p], b_comb [1, N2p] f32, f_out)."""
    f_out, f_in = w_h.shape
    assert w_v.shape == (f_out, f_in)
    assert height == f_in and width == f_in, "cls_fea_hv requires H == W == f_in"

    k = depth * height * width
    n2 = 2 * f_out
    n2p = _round_up(max(n2, 128), 128)  # lane-dense output width

    wh32 = w_h.astype(jnp.float32)  # (f_out, W)
    wv32 = w_v.astype(jnp.float32)  # (f_out, H)
    # Row (d, h, w) of the combined weight:
    #   h-branch column o: w_h[o, w] / (D*H);  v-branch column o: w_v[o, h] / (D*W)
    wch = jnp.broadcast_to(wh32.T[None, None, :, :], (depth, height, width, f_out))
    wch = wch / float(depth * height)
    wcv = jnp.broadcast_to(wv32.T[None, :, None, :], (depth, height, width, f_out))
    wcv = wcv / float(depth * width)
    parts = [wch, wcv]
    if n2p > n2:
        parts.append(jnp.zeros((depth, height, width, n2p - n2), jnp.float32))
    w_comb = jnp.concatenate(parts, axis=-1).reshape(k, n2p)

    b_parts = [b_h.astype(jnp.float32), b_v.astype(jnp.float32)]
    if n2p > n2:
        b_parts.append(jnp.zeros((n2p - n2,), jnp.float32))
    b_comb = jnp.concatenate(b_parts).reshape(1, n2p)

    # bf16 inputs get bf16 weights (MXU native); note the 1/(D*H), 1/(D*W)
    # scales are then quantized to bf16 -> use bf16-level test tolerances.
    w_dtype = jnp.bfloat16 if x_dtype == jnp.bfloat16 else jnp.float32
    return w_comb.astype(w_dtype), b_comb, f_out


# ------------------------------- entry point -------------------------------- #


def cls_fea_hv_fused(x, w_comb, b_comb, f_out, *, tm=None, tk=None):
    """x: (B, C, D, H, W); w_comb/b_comb from make_cls_fea_hv_params.
    Returns (x_h, x_v), each (B, C, f_out)."""
    B, C, D, H, W = x.shape
    M = B * C
    K = D * H * W
    kw, n2p = w_comb.shape
    assert kw == K, "w_comb was built for a different (D, H, W)"
    assert n2p % 128 == 0 and 2 * f_out <= n2p

    out_dtype = x.dtype if jnp.issubdtype(x.dtype, jnp.floating) else jnp.float32
    x_isz = np.dtype(x.dtype).itemsize
    w_isz = np.dtype(w_comb.dtype).itemsize
    o_isz = np.dtype(out_dtype).itemsize

    # Lane-dense (B*C, K) slab: a free reshape, no pad, no dtype cast.
    x2d = x.reshape(M, K)
    M_eff = M
    if M < 8:  # only truly tiny inputs get padded up to one sublane tile
        x2d = jnp.pad(x2d, ((0, 8 - M), (0, 0)))
        M_eff = 8

    vmem_limit = _vmem_limit_bytes()
    budget = max(vmem_limit - (4 << 20), 4 << 20)  # headroom for internal scratch

    # ---- K-tiling decision (monolithic resident weight vs streamed K tiles) --
    if tk is None:
        w_res = 2 * K * n2p * w_isz                  # double-buffered resident weight
        row_b = 2 * K * x_isz + 2 * n2p * o_isz      # per-row x + out (double-buffered)
        tk_sel = 0 if (w_res + 8 * row_b) <= budget else _choose_tk(K, n2p, w_isz, budget)
    else:
        tk_sel = int(tk)
    k_tiled = tk_sel > 0

    if k_tiled:
        tk_sel = max(128, (min(tk_sel, _round_up(K, 128)) // 128) * 128)
        k_pad = _round_up(K, tk_sel)
        w_use = w_comb if k_pad == K else jnp.pad(w_comb, ((0, k_pad - K), (0, 0)))
        n_k = k_pad // tk_sel
        w_res = 2 * tk_sel * n2p * w_isz
        row_b = 2 * tk_sel * x_isz + 2 * n2p * o_isz + n2p * 4  # + f32 accumulator
    else:
        k_pad, w_use, n_k = K, w_comb, 1
        w_res = 2 * K * n2p * w_isz
        row_b = 2 * K * x_isz + 2 * n2p * o_isz

    # ---- M tile: as large as the VMEM budget allows (cap 2048), but keep
    # >= 4 grid steps when there is enough work (>= 2 per v7x TensorCore). ----
    if tm is None:
        rows_vmem = max(8, ((budget - w_res) // max(row_b, 1)) // 8 * 8)
        rows_steps = max(8, (M_eff // 4) // 8 * 8) if M_eff >= 32 else M_eff
        m_floor = max(8, (M_eff // 8) * 8)
        tm_sel = int(max(8, min(2048, rows_vmem, rows_steps, m_floor)))
    else:
        tm_sel = int(tm)
    n_m = pl.cdiv(M_eff, tm_sel)

    if k_tiled:
        kernel = _make_ktiled_kernel(K, tk_sel, k_pad != K)
        grid = (n_m, n_k)
        in_specs = [
            pl.BlockSpec((tm_sel, tk_sel), lambda i, k: (i, k)),
            pl.BlockSpec((tk_sel, n2p), lambda i, k: (k, 0)),
            pl.BlockSpec((1, n2p), lambda i, k: (0, 0)),
        ]
        out_specs = pl.BlockSpec((tm_sel, n2p), lambda i, k: (i, 0))
        scratch = (pltpu.VMEM((tm_sel, n2p), jnp.float32),)
        dims = ("parallel", "arbitrary")
    else:
        kernel = _fused_kernel
        grid = (n_m,)
        in_specs = [
            pl.BlockSpec((tm_sel, K), lambda i: (i, 0)),
            pl.BlockSpec((K, n2p), lambda i: (0, 0)),    # grid-resident weight
            pl.BlockSpec((1, n2p), lambda i: (0, 0)),    # grid-resident bias
        ]
        out_specs = pl.BlockSpec((tm_sel, n2p), lambda i: (i, 0))
        scratch = ()
        dims = ("parallel",)

    out = pl.pallas_call(
        kernel,
        out_shape=jax.ShapeDtypeStruct((M_eff, n2p), out_dtype),
        grid=grid,
        in_specs=in_specs,
        out_specs=out_specs,
        scratch_shapes=scratch,
        compiler_params=pltpu.CompilerParams(
            dimension_semantics=dims,
            vmem_limit_bytes=int(vmem_limit),
        ),
    )(x2d, w_use, b_comb)

    oh = out[:M, :f_out].reshape(B, C, f_out)
    ov = out[:M, f_out:2 * f_out].reshape(B, C, f_out)
    return oh, ov


def cls_fea_hv(x, w_h, b_h, w_v, b_v, **kwargs):
    """Drop-in equivalent of the PyTorch module's forward.  For repeated calls
    with fixed weights, hoist make_cls_fea_hv_params and call cls_fea_hv_fused."""
    B, C, D, H, W = x.shape
    w_comb, b_comb, f_out = make_cls_fea_hv_params(w_h, b_h, w_v, b_v, D, H, W, x.dtype)
    return cls_fea_hv_fused(x, w_comb, b_comb, f_out, **kwargs)


def cls_fea_hv_ref(x, w_h, b_h, w_v, b_v):
    # Literal translation of the PyTorch forward (f32 math).
    y = jnp.mean(x.astype(jnp.float32), axis=2)        # (B, C, H, W)
    x_h = jnp.mean(y, axis=2)                          # (B, C, W)
    x_v = jnp.mean(y, axis=3)                          # (B, C, H)
    oh = jnp.einsum("bcw,ow->bco", x_h, w_h.astype(jnp.float32)) + b_h.astype(jnp.float32)
    ov = jnp.einsum("bch,oh->bco", x_v, w_v.astype(jnp.float32)) + b_v.astype(jnp.float32)
    return oh.astype(x.dtype), ov.astype(x.dtype)


if __name__ == "__main__":
    key = jax.random.PRNGKey(0)
    kx, kwh, kbh, kwv, kbv, kx2 = jax.random.split(key, 6)

    # Shapes consistent with the module: x (B, C, D, H, W); Linear(f_in, f_out), f_in = H = W.
    B, C, D = 2, 4, 3
    f_in, f_out = 16, 8
    H = W = f_in

    x = jax.random.normal(kx, (B, C, D, H, W), dtype=jnp.float32)
    bound = 1.0 / (f_in ** 0.5)
    w_h = jax.random.uniform(kwh, (f_out, f_in), jnp.float32, -bound, bound)
    b_h = jax.random.uniform(kbh, (f_out,), jnp.float32, -bound, bound)
    w_v = jax.random.uniform(kwv, (f_out, f_in), jnp.float32, -bound, bound)
    b_v = jax.random.uniform(kbv, (f_out,), jnp.float32, -bound, bound)

    def check(got, want, atol, rtol, name):
        gh, gv = got
        rh, rv = want
        assert gh.shape == rh.shape and gv.shape == rv.shape, name + " shape"
        assert jnp.allclose(gh.astype(jnp.float32), rh.astype(jnp.float32),
                            atol=atol, rtol=rtol), name + " (h)"
        assert jnp.allclose(gv.astype(jnp.float32), rv.astype(jnp.float32),
                            atol=atol, rtol=rtol), name + " (v)"

    ref = cls_fea_hv_ref(x, w_h, b_h, w_v, b_v)

    # Hoisted, one-time weight prep (reused by configs 1 and 2).
    w_comb, b_comb, fo = make_cls_fea_hv_params(w_h, b_h, w_v, b_v, D, H, W, x.dtype)

    # 1) auto path: monolithic-K fused matmul, auto-sized tiles.
    out1 = cls_fea_hv_fused(x, w_comb, b_comb, fo)
    jax.block_until_ready(out1)
    check(out1, ref, 1e-4, 1e-4, "auto")

    # 2) forced K-tiled fallback (exercises accumulator + ragged-K masking:
    #    K = 768 streamed as two tk = 512 tiles, weight zero-padded to 1024).
    out2 = cls_fea_hv_fused(x, w_comb, b_comb, fo, tm=8, tk=512)
    jax.block_until_ready(out2)
    check(out2, ref, 1e-4, 1e-4, "k_tiled")

    # 3) ragged M (B*C = 15 not a multiple of the row tile) with a different depth.
    B3, C3, D3 = 3, 5, 2
    x3 = jax.random.normal(kx2, (B3, C3, D3, H, W), dtype=jnp.float32)
    out3 = cls_fea_hv(x3, w_h, b_h, w_v, b_v)
    jax.block_until_ready(out3)
    check(out3, cls_fea_hv_ref(x3, w_h, b_h, w_v, b_v), 1e-4, 1e-4, "ragged_m")

    # 4) bf16 path (weights quantized to bf16 -> bf16-level tolerance).
    xb = x.astype(jnp.bfloat16)
    outb = cls_fea_hv(xb, w_h, b_h, w_v, b_v)
    jax.block_until_ready(outb)
    check(outb, cls_fea_hv_ref(xb, w_h, b_h, w_v, b_v), 5e-2, 5e-2, "bf16")

    print("KERNEL_OK")
</pallas_src>

<mosaic_0001>
module attributes {stable_mosaic.version = 11 : i64} {
  func.func @_fused_kernel(%arg0: i32, %arg1: memref<8x768xf32, #tpu.memory_space<vmem>>, %arg2: memref<768x128xf32, #tpu.memory_space<vmem>>, %arg3: memref<1x128xf32, #tpu.memory_space<vmem>>, %arg4: memref<8x128xf32, #tpu.memory_space<vmem>>) attributes {dimension_semantics = [#tpu.dimension_semantics<parallel>], iteration_bounds = array<i64: 1>, scalar_prefetch = 0 : i64, scratch_operands = 0 : i64, tpu.core_type = #tpu.core_type<tc>, window_params = [{transform_indices = @transform_0, window_bounds = array<i64: 8, 768>}, {pipeline_mode = #tpu.pipeline_mode<synchronous>, transform_indices = @transform_1, window_bounds = array<i64: 768, 128>}, {pipeline_mode = #tpu.pipeline_mode<synchronous>, transform_indices = @transform_2, window_bounds = array<i64: 1, 128>}, {transform_indices = @transform_3, window_bounds = array<i64: 8, 128>}]} {
    %c0 = arith.constant 0 : index
    %c0_0 = arith.constant 0 : index
    %0 = vector.load %arg1[%c0, %c0_0] : memref<8x768xf32, #tpu.memory_space<vmem>>, vector<8x768xf32>
    %c0_1 = arith.constant 0 : index
    %c0_2 = arith.constant 0 : index
    %1 = vector.load %arg2[%c0_1, %c0_2] : memref<768x128xf32, #tpu.memory_space<vmem>>, vector<768x128xf32>
    %cst = arith.constant dense<0.000000e+00> : vector<8x128xf32>
    %2 = tpu.matmul %0, %1, %cst {dimension_numbers = #tpu.dot_dimension_numbers<[1], [0], [0], [1], [0, 0, 1, 1], [], []>} : vector<8x768xf32>, vector<768x128xf32>, vector<8x128xf32> -> vector<8x128xf32>
    %c0_3 = arith.constant 0 : index
    %c0_4 = arith.constant 0 : index
    %3 = vector.load %arg3[%c0_3, %c0_4] : memref<1x128xf32, #tpu.memory_space<vmem>>, vector<1x128xf32>
    %4 = vector.broadcast %3 : vector<1x128xf32> to vector<8x128xf32>
    %5 = arith.addf %2, %4 : vector<8x128xf32>
    %c0_5 = arith.constant 0 : index
    %c0_6 = arith.constant 0 : index
    %6 = vector.load %arg4[%c0_5, %c0_6] : memref<8x128xf32, #tpu.memory_space<vmem>>, vector<8x128xf32>
    tpu.vector_store %arg4[%c0_5, %c0_6], %5 {strides = array<i32>} : memref<8x128xf32, #tpu.memory_space<vmem>>, vector<8x128xf32>,
    return
  }
  func.func @transform_0(%arg0: i32) -> (i32, i32) {
    %c0_i32 = arith.constant 0 : i32
    %c0_i32_0 = arith.constant 0 : i32
    return %arg0, %c0_i32 : i32, i32
  }
  func.func @transform_1(%arg0: i32) -> (i32, i32) {
    %c0_i32 = arith.constant 0 : i32
    %c0_i32_0 = arith.constant 0 : i32
    %c0_i32_1 = arith.constant 0 : i32
    return %c0_i32, %c0_i32_0 : i32, i32
  }
  func.func @transform_2(%arg0: i32) -> (i32, i32) {
    %c0_i32 = arith.constant 0 : i32
    %c0_i32_0 = arith.constant 0 : i32
    %c0_i32_1 = arith.constant 0 : i32
    return %c0_i32, %c0_i32_0 : i32, i32
  }
  func.func @transform_3(%arg0: i32) -> (i32, i32) {
    %c0_i32 = arith.constant 0 : i32
    %c0_i32_0 = arith.constant 0 : i32
    return %arg0, %c0_i32 : i32, i32
  }
}

</mosaic_0001>

<llo_original>
// kernel: tpu_custom_call.1
$region0: #{tpu_custom_call.1}
  #allocation0 [shape = 'u32[]', space=smem, size = 0x4, offset = 0x4, fixed_abs, tag = 'smem constant byte address 0x4 - core index']
  #allocation1 [shape = 'u32[144,128]{1,0:T(1,128)}', space=vmem, size = 0x12000, scoped, tag = 'internal scratch']
  %s0 = inlined_call_operand.hbm [shape: f32[8,768], index: 0, kind: input, shape index: {}]
  %s1 = inlined_call_operand.hbm [shape: f32[768,128], index: 1, kind: input, shape index: {}]
  %s2 = inlined_call_operand.vmem [shape: f32[1,128], index: 2, kind: input, shape index: {}]
  %s3 = inlined_call_operand.hbm [shape: f32[8,128], index: 3, kind: output, shape index: {}]
  %s4 = sld [smem:[#allocation0]]
  $region30: #{tpu_custom_call.1} parent=0
    _
  %s6 = ssub.s32 1, %s4
  %s7 = scalar_select 0, %s6, %s4
  $region1: #{tpu_custom_call.1} parent=0
    #allocation2 [shape = 'u8[24576]{0}', space=vmem, size = 0x6000, scoped, tag = 'input window, operand 0, single buffered']
    #allocation3 [shape = 's32[1]{0}', space=sflag, size = 0x4, scoped, tag = 'scoped memory for tpu_custom_call.1']
    #allocation4 [shape = 's32[1]{0}', space=sflag, size = 0x4, scoped, tag = 'scoped memory for tpu_custom_call.1']
    #allocation5 [shape = 'u8[393216]{0}', space=vmem, size = 0x60000, scoped, tag = 'input window, operand 1, single buffered']
    #allocation6 [shape = 's32[1]{0}', space=sflag, size = 0x4, scoped, tag = 'scoped memory for tpu_custom_call.1']
    #allocation7 [shape = 'u8[4096]{0}', space=vmem, size = 0x1000, scoped, tag = 'output window, operand 0, single buffered']
    %8 = vsyncpa [#allocation3], 0
    %9 = vsyncpa [#allocation6], 0
    %10 = vsyncpa [#allocation4], 0
    // Predicated region
    $region2: #{tpu_custom_call.1} parent=1 // pred_check
      _
    $region3: #{tpu_custom_call.1} parent=1 // pred_check_branch
      %12 = sbr.rel (0) target = $region5
    $region4: #{tpu_custom_call.1} parent=1 // pred_region
      %s14 = ssub.s32 768, 768
      %15 = vsyncadd [#allocation3], %s14
      %s17 = sshll.u32 [#allocation2], 4
      %s18 = int_to_ptr.vmem [resolvable:$true] %s17
      %20 = dma.hbm_to_vmem [thread:$0]  %s0, 768, %s18, [#allocation3]
    $region5: #{tpu_custom_call.1} parent=1 // pred_fallthru
      _
    // Predicated region
    $region6: #{tpu_custom_call.1} parent=1 // pred_check
      _
    $region7: #{tpu_custom_call.1} parent=1 // pred_check_branch
      %22 = sbr.rel (0) target = $region9
    $region8: #{tpu_custom_call.1} parent=1 // pred_region
      %s24 = ssub.s32 12288, 12288
      %25 = vsyncadd [#allocation6], %s24
      %s26 = sshll.u32 [#allocation5], 4
      %s27 = int_to_ptr.vmem [resolvable:$true] %s26
      %32 = dma.hbm_to_vmem [thread:$0]  %s1, 12288, %s27, [#allocation6], 128, 128, 8
    $region9: #{tpu_custom_call.1} parent=1 // pred_fallthru
      _
    // Predicated region
    $region10: #{tpu_custom_call.1} parent=1 // pred_check
      _
    $region11: #{tpu_custom_call.1} parent=1 // pred_check_branch
      %34 = sbr.rel (0) target = $region13
    $region12: #{tpu_custom_call.1} parent=1 // pred_region
      _
    $region13: #{tpu_custom_call.1} parent=1 // pred_fallthru
      _
    // Predicated region
    $region14: #{tpu_custom_call.1} parent=1 // pred_check
      _
    $region15: #{tpu_custom_call.1} parent=1 // pred_check_branch
      %36 = sbr.rel (0) target = $region17
    $region16: #{tpu_custom_call.1} parent=1 // pred_region
      %37 = dma.done [#allocation3], 768
    $region17: #{tpu_custom_call.1} parent=1 // pred_fallthru
      _
    // Predicated region
    $region18: #{tpu_custom_call.1} parent=1 // pred_check
      _
    $region19: #{tpu_custom_call.1} parent=1 // pred_check_branch
      %39 = sbr.rel (0) target = $region21
    $region20: #{tpu_custom_call.1} parent=1 // pred_region
      %40 = dma.done [#allocation6], 12288
    $region21: #{tpu_custom_call.1} parent=1 // pred_fallthru
      _
    %v41 = vld [vmem:[#allocation2] sm:$0xff]
    %v42 = vld [vmem:[#allocation2 + $0x8] sm:$0xff]
    %v43 = vld [vmem:[#allocation2 + $0x10] sm:$0xff]
    %v44 = vld [vmem:[#allocation2 + $0x18] sm:$0xff]
    %v45 = vld [vmem:[#allocation2 + $0x20] sm:$0xff]
    %v46 = vld [vmem:[#allocation2 + $0x28] sm:$0xff]
    %v47 = vld [vmem:[#allocation5] sm:$0xff]
    %v48 = vld [vmem:[#allocation5 + $0x8] sm:$0xff]
    %v49 = vld [vmem:[#allocation5 + $0x10] sm:$0xff]
    %v50 = vld [vmem:[#allocation5 + $0x18] sm:$0xff]
    %v51 = vld [vmem:[#allocation5 + $0x20] sm:$0xff]
    %v52 = vld [vmem:[#allocation5 + $0x28] sm:$0xff]
    %v53 = vld [vmem:[#allocation5 + $0x30] sm:$0xff]
    %v54 = vld [vmem:[#allocation5 + $0x38] sm:$0xff]
    %v55 = vld [vmem:[#allocation5 + $0x40] sm:$0xff]
    %v56 = vld [vmem:[#allocation5 + $0x48] sm:$0xff]
    %v57 = vld [vmem:[#allocation5 + $0x50] sm:$0xff]
    %v58 = vld [vmem:[#allocation5 + $0x58] sm:$0xff]
    %v59 = vld [vmem:[#allocation5 + $0x60] sm:$0xff]
    %v60 = vld [vmem:[#allocation5 + $0x68] sm:$0xff]
    %v61 = vld [vmem:[#allocation5 + $0x70] sm:$0xff]
    %v62 = vld [vmem:[#allocation5 + $0x78] sm:$0xff]
    %v63 = vld [vmem:[#allocation5 + $0x80] sm:$0xff]
    %v64 = vld [vmem:[#allocation5 + $0x88] sm:$0xff]
    %v65 = vld [vmem:[#allocation5 + $0x90] sm:$0xff]
    %v66 = vld [vmem:[#allocation5 + $0x98] sm:$0xff]
    %v67 = vld [vmem:[#allocation5 + $0xa0] sm:$0xff]
    %v68 = vld [vmem:[#allocation5 + $0xa8] sm:$0xff]
    %v69 = vld [vmem:[#allocation5 + $0xb0] sm:$0xff]
    %v70 = vld [vmem:[#allocation5 + $0xb8] sm:$0xff]
    %v71 = vld [vmem:[#allocation5 + $0xc0] sm:$0xff]
    %v72 = vld [vmem:[#allocation5 + $0xc8] sm:$0xff]
    %v73 = vld [vmem:[#allocation5 + $0xd0] sm:$0xff]
    %v74 = vld [vmem:[#allocation5 + $0xd8] sm:$0xff]
    %v75 = vld [vmem:[#allocation5 + $0xe0] sm:$0xff]
    %v76 = vld [vmem:[#allocation5 + $0xe8] sm:$0xff]
    %v77 = vld [vmem:[#allocation5 + $0xf0] sm:$0xff]
    %v78 = vld [vmem:[#allocation5 + $0xf8] sm:$0xff]
    %v79 = vld [vmem:[#allocation5 + $0x100] sm:$0xff]
    %v80 = vld [vmem:[#allocation5 + $0x108] sm:$0xff]
    %v81 = vld [vmem:[#allocation5 + $0x110] sm:$0xff]
    %v82 = vld [vmem:[#allocation5 + $0x118] sm:$0xff]
    %v83 = vld [vmem:[#allocation5 + $0x120] sm:$0xff]
    %v84 = vld [vmem:[#allocation5 + $0x128] sm:$0xff]
    %v85 = vld [vmem:[#allocation5 + $0x130] sm:$0xff]
    %v86 = vld [vmem:[#allocation5 + $0x138] sm:$0xff]
    %v87 = vld [vmem:[#allocation5 + $0x140] sm:$0xff]
    %v88 = vld [vmem:[#allocation5 + $0x148] sm:$0xff]
    %v89 = vld [vmem:[#allocation5 + $0x150] sm:$0xff]
    %v90 = vld [vmem:[#allocation5 + $0x158] sm:$0xff]
    %v91 = vld [vmem:[#allocation5 + $0x160] sm:$0xff]
    %v92 = vld [vmem:[#allocation5 + $0x168] sm:$0xff]
    %v93 = vld [vmem:[#allocation5 + $0x170] sm:$0xff]
    %v94 = vld [vmem:[#allocation5 + $0x178] sm:$0xff]
    %v95 = vld [vmem:[#allocation5 + $0x180] sm:$0xff]
    %v96 = vld [vmem:[#allocation5 + $0x188] sm:$0xff]
    %v97 = vld [vmem:[#allocation5 + $0x190] sm:$0xff]
    %v98 = vld [vmem:[#allocation5 + $0x198] sm:$0xff]
    %v99 = vld [vmem:[#allocation5 + $0x1a0] sm:$0xff]
    %v100 = vld [vmem:[#allocation5 + $0x1a8] sm:$0xff]
    %v101 = vld [vmem:[#allocation5 + $0x1b0] sm:$0xff]
    %v102 = vld [vmem:[#allocation5 + $0x1b8] sm:$0xff]
    %v103 = vld [vmem:[#allocation5 + $0x1c0] sm:$0xff]
    %v104 = vld [vmem:[#allocation5 + $0x1c8] sm:$0xff]
    %v105 = vld [vmem:[#allocation5 + $0x1d0] sm:$0xff]
    %v106 = vld [vmem:[#allocation5 + $0x1d8] sm:$0xff]
    %v107 = vld [vmem:[#allocation5 + $0x1e0] sm:$0xff]
    %v108 = vld [vmem:[#allocation5 + $0x1e8] sm:$0xff]
    %v109 = vld [vmem:[#allocation5 + $0x1f0] sm:$0xff]
    %v110 = vld [vmem:[#allocation5 + $0x1f8] sm:$0xff]
    %v111 = vld [vmem:[#allocation5 + $0x200] sm:$0xff]
    %v112 = vld [vmem:[#allocation5 + $0x208] sm:$0xff]
    %v113 = vld [vmem:[#allocation5 + $0x210] sm:$0xff]
    %v114 = vld [vmem:[#allocation5 + $0x218] sm:$0xff]
    %v115 = vld [vmem:[#allocation5 + $0x220] sm:$0xff]
    %v116 = vld [vmem:[#allocation5 + $0x228] sm:$0xff]
    %v117 = vld [vmem:[#allocation5 + $0x230] sm:$0xff]
    %v118 = vld [vmem:[#allocation5 + $0x238] sm:$0xff]
    %v119 = vld [vmem:[#allocation5 + $0x240] sm:$0xff]
    %v120 = vld [vmem:[#allocation5 + $0x248] sm:$0xff]
    %v121 = vld [vmem:[#allocation5 + $0x250] sm:$0xff]
    %v122 = vld [vmem:[#allocation5 + $0x258] sm:$0xff]
    %v123 = vld [vmem:[#allocation5 + $0x260] sm:$0xff]
    %v124 = vld [vmem:[#allocation5 + $0x268] sm:$0xff]
    %v125 = vld [vmem:[#allocation5 + $0x270] sm:$0xff]
    %v126 = vld [vmem:[#allocation5 + $0x278] sm:$0xff]
    %v127 = vld [vmem:[#allocation5 + $0x280] sm:$0xff]
    %v128 = vld [vmem:[#allocation5 + $0x288] sm:$0xff]
    %v129 = vld [vmem:[#allocation5 + $0x290] sm:$0xff]
    %v130 = vld [vmem:[#allocation5 + $0x298] sm:$0xff]
    %v131 = vld [vmem:[#allocation5 + $0x2a0] sm:$0xff]
    %v132 = vld [vmem:[#allocation5 + $0x2a8] sm:$0xff]
    %v133 = vld [vmem:[#allocation5 + $0x2b0] sm:$0xff]
    %v134 = vld [vmem:[#allocation5 + $0x2b8] sm:$0xff]
    %v135 = vld [vmem:[#allocation5 + $0x2c0] sm:$0xff]
    %v136 = vld [vmem:[#allocation5 + $0x2c8] sm:$0xff]
    %v137 = vld [vmem:[#allocation5 + $0x2d0] sm:$0xff]
    %v138 = vld [vmem:[#allocation5 + $0x2d8] sm:$0xff]
    %v139 = vld [vmem:[#allocation5 + $0x2e0] sm:$0xff]
    %v140 = vld [vmem:[#allocation5 + $0x2e8] sm:$0xff]
    %v141 = vld [vmem:[#allocation5 + $0x2f0] sm:$0xff]
    %v142 = vld [vmem:[#allocation5 + $0x2f8] sm:$0xff]
    %v143 = vld [vmem:[%s2] sm:$0x1]
    %v145 = vlaneseq
    %v146 = vshrl.u32 %v145, 7
    %v147 = vsub.s32 0, %v146
    %v148 = vrot.slane %v143, %v147
    %150 = vmatprep.subr.mxu0 0.0
    %151 = vmatpush1.msra.mxu0 %v47
    %152 = vmatprep.subr.mxu0 0.0
    %153 = vmatpush1.msra.mxu0 %v48
    %154 = vmatprep.subr.mxu0 0.0
    %155 = vmatpush1.msra.mxu0 %v49
    %156 = vmatprep.subr.mxu0 0.0
    %157 = vmatpush1.msra.mxu0 %v50
    %158 = vmatprep.subr.mxu0 0.0
    %159 = vmatpush1.msra.mxu0 %v51
    %160 = vmatprep.subr.mxu0 0.0
    %161 = vmatpush1.msra.mxu0 %v52
    %162 = vmatprep.subr.mxu0 0.0
    %163 = vmatpush1.msra.mxu0 %v53
    %164 = vmatprep.subr.mxu0 0.0
    %165 = vmatpush1.msra.mxu0 %v54
    %166 = vmatprep.subr.mxu0 0.0
    %167 = vmatpush1.msra.mxu0 %v55
    %168 = vmatprep.subr.mxu0 0.0
    %169 = vmatpush1.msra.mxu0 %v56
    %170 = vmatprep.subr.mxu0 0.0
    %171 = vmatpush1.msra.mxu0 %v57
    %172 = vmatprep.subr.mxu0 0.0
    %173 = vmatpush1.msra.mxu0 %v58
    %174 = vmatprep.subr.mxu0 0.0
    %175 = vmatpush1.msra.mxu0 %v59
    %176 = vmatprep.subr.mxu0 0.0
    %177 = vmatpush1.msra.mxu0 %v60
    %178 = vmatprep.subr.mxu0 0.0
    %179 = vmatpush1.msra.mxu0 %v61
    %180 = vmatprep.subr.mxu0 0.0
    %181 = vmatpush1.msra.mxu0 %v62
    %182 = vmatprep.subr.mxu0 0.0
    %183 = vmatpush1.msra.mxu0 %v63
    %184 = vmatprep.subr.mxu0 0.0
    %185 = vmatpush1.msra.mxu0 %v64
    %186 = vmatprep.subr.mxu0 0.0
    %187 = vmatpush1.msra.mxu0 %v65
    %188 = vmatprep.subr.mxu0 0.0
    %189 = vmatpush1.msra.mxu0 %v66
    %190 = vmatprep.subr.mxu0 0.0
    %191 = vmatpush1.msra.mxu0 %v67
    %192 = vmatprep.subr.mxu0 0.0
    %193 = vmatpush1.msra.mxu0 %v68
    %194 = vmatprep.subr.mxu0 0.0
    %195 = vmatpush1.msra.mxu0 %v69
    %196 = vmatprep.subr.mxu0 0.0
    %197 = vmatpush1.msra.mxu0 %v70
    %198 = vmatprep.subr.mxu0 0.0
    %199 = vmatpush1.msra.mxu0 %v71
    %200 = vmatprep.subr.mxu0 0.0
    %201 = vmatpush1.msra.mxu0 %v72
    %202 = vmatprep.subr.mxu0 0.0
    %203 = vmatpush1.msra.mxu0 %v73
    %204 = vmatprep.subr.mxu0 0.0
    %205 = vmatpush1.msra.mxu0 %v74
    %206 = vmatprep.subr.mxu0 0.0
    %207 = vmatpush1.msra.mxu0 %v75
    %208 = vmatprep.subr.mxu0 0.0
    %209 = vmatpush1.msra.mxu0 %v76
    %210 = vmatprep.subr.mxu0 0.0
    %211 = vmatpush1.msra.mxu0 %v77
    %212 = vmatprep.subr.mxu0 0.0
    %213 = vmatpush1.msra.mxu0 %v78
    %214 = vmatprep.mubr.f32.mxu0 %v42
    %215 = vmatmul.mubr.f32.gmra.mrb[0].mxu0 %v41
    %v216 = vpop.f32.mrb[0].mxu0
    %v217 = vadd.f32 %v148, %v216
    %v218 = vpop.f32.mrb[0].mxu0
    %219 = vdwg.mxu0
    %220 = vmatprep.subr.mxu0 0.0
    %221 = vmatpush1.msra.mxu0 %v79
    %222 = vmatprep.subr.mxu0 0.0
    %223 = vmatpush1.msra.mxu0 %v80
    %224 = vmatprep.subr.mxu0 0.0
    %225 = vmatpush1.msra.mxu0 %v81
    %226 = vmatprep.subr.mxu0 0.0
    %227 = vmatpush1.msra.mxu0 %v82
    %228 = vmatprep.subr.mxu0 0.0
    %229 = vmatpush1.msra.mxu0 %v83
    %230 = vmatprep.subr.mxu0 0.0
    %231 = vmatpush1.msra.mxu0 %v84
    %232 = vmatprep.subr.mxu0 0.0
    %233 = vmatpush1.msra.mxu0 %v85
    %234 = vmatprep.subr.mxu0 0.0
    %235 = vmatpush1.msra.mxu0 %v86
    %236 = vmatprep.subr.mxu0 0.0
    %237 = vmatpush1.msra.mxu0 %v87
    %238 = vmatprep.subr.mxu0 0.0
    %239 = vmatpush1.msra.mxu0 %v88
    %240 = vmatprep.subr.mxu0 0.0
    %241 = vmatpush1.msra.mxu0 %v89
    %242 = vmatprep.subr.mxu0 0.0
    %243 = vmatpush1.msra.mxu0 %v90
    %244 = vmatprep.subr.mxu0 0.0
    %245 = vmatpush1.msra.mxu0 %v91
    %246 = vmatprep.subr.mxu0 0.0
    %247 = vmatpush1.msra.mxu0 %v92
    %248 = vmatprep.subr.mxu0 0.0
    %249 = vmatpush1.msra.mxu0 %v93
    %250 = vmatprep.subr.mxu0 0.0
    %251 = vmatpush1.msra.mxu0 %v94
    %252 = vmatprep.subr.mxu0 0.0
    %253 = vmatpush1.msra.mxu0 %v95
    %254 = vmatprep.subr.mxu0 0.0
    %255 = vmatpush1.msra.mxu0 %v96
    %256 = vmatprep.subr.mxu0 0.0
    %257 = vmatpush1.msra.mxu0 %v97
    %258 = vmatprep.subr.mxu0 0.0
    %259 = vmatpush1.msra.mxu0 %v98
    %260 = vmatprep.subr.mxu0 0.0
    %261 = vmatpush1.msra.mxu0 %v99
    %262 = vmatprep.subr.mxu0 0.0
    %263 = vmatpush1.msra.mxu0 %v100
    %264 = vmatprep.subr.mxu0 0.0
    %265 = vmatpush1.msra.mxu0 %v101
    %266 = vmatprep.subr.mxu0 0.0
    %267 = vmatpush1.msra.mxu0 %v102
    %268 = vmatprep.subr.mxu0 0.0
    %269 = vmatpush1.msra.mxu0 %v103
    %270 = vmatprep.subr.mxu0 0.0
    %271 = vmatpush1.msra.mxu0 %v104
    %272 = vmatprep.subr.mxu0 0.0
    %273 = vmatpush1.msra.mxu0 %v105
    %274 = vmatprep.subr.mxu0 0.0
    %275 = vmatpush1.msra.mxu0 %v106
    %276 = vmatprep.subr.mxu0 0.0
    %277 = vmatpush1.msra.mxu0 %v107
    %278 = vmatprep.subr.mxu0 0.0
    %279 = vmatpush1.msra.mxu0 %v108
    %280 = vmatprep.subr.mxu0 0.0
    %281 = vmatpush1.msra.mxu0 %v109
    %282 = vmatprep.subr.mxu0 0.0
    %283 = vmatpush1.msra.mxu0 %v110
    %284 = vmatprep.mubr.f32.mxu0 %v44
    %285 = vmatmul.mubr.f32.gmra.mrb[0].mxu0 %v43
    %v286 = vpop.f32.mrb[0].mxu0
    %v287 = vadd.f32 %v217, %v286
    %v288 = vpop.f32.mrb[0].mxu0
    %289 = vdwg.mxu0
    %290 = vmatprep.subr.mxu0 0.0
    %291 = vmatpush1.msra.mxu0 %v111
    %292 = vmatprep.subr.mxu0 0.0
    %293 = vmatpush1.msra.mxu0 %v112
    %294 = vmatprep.subr.mxu0 0.0
    %295 = vmatpush1.msra.mxu0 %v113
    %296 = vmatprep.subr.mxu0 0.0
    %297 = vmatpush1.msra.mxu0 %v114
    %298 = vmatprep.subr.mxu0 0.0
    %299 = vmatpush1.msra.mxu0 %v115
    %300 = vmatprep.subr.mxu0 0.0
    %301 = vmatpush1.msra.mxu0 %v116
    %302 = vmatprep.subr.mxu0 0.0
    %303 = vmatpush1.msra.mxu0 %v117
    %304 = vmatprep.subr.mxu0 0.0
    %305 = vmatpush1.msra.mxu0 %v118
    %306 = vmatprep.subr.mxu0 0.0
    %307 = vmatpush1.msra.mxu0 %v119
    %308 = vmatprep.subr.mxu0 0.0
    %309 = vmatpush1.msra.mxu0 %v120
    %310 = vmatprep.subr.mxu0 0.0
    %311 = vmatpush1.msra.mxu0 %v121
    %312 = vmatprep.subr.mxu0 0.0
    %313 = vmatpush1.msra.mxu0 %v122
    %314 = vmatprep.subr.mxu0 0.0
    %315 = vmatpush1.msra.mxu0 %v123
    %316 = vmatprep.subr.mxu0 0.0
    %317 = vmatpush1.msra.mxu0 %v124
    %318 = vmatprep.subr.mxu0 0.0
    %319 = vmatpush1.msra.mxu0 %v125
    %320 = vmatprep.subr.mxu0 0.0
    %321 = vmatpush1.msra.mxu0 %v126
    %322 = vmatprep.subr.mxu0 0.0
    %323 = vmatpush1.msra.mxu0 %v127
    %324 = vmatprep.subr.mxu0 0.0
    %325 = vmatpush1.msra.mxu0 %v128
    %326 = vmatprep.subr.mxu0 0.0
    %327 = vmatpush1.msra.mxu0 %v129
    %328 = vmatprep.subr.mxu0 0.0
    %329 = vmatpush1.msra.mxu0 %v130
    %330 = vmatprep.subr.mxu0 0.0
    %331 = vmatpush1.msra.mxu0 %v131
    %332 = vmatprep.subr.mxu0 0.0
    %333 = vmatpush1.msra.mxu0 %v132
    %334 = vmatprep.subr.mxu0 0.0
    %335 = vmatpush1.msra.mxu0 %v133
    %336 = vmatprep.subr.mxu0 0.0
    %337 = vmatpush1.msra.mxu0 %v134
    %338 = vmatprep.subr.mxu0 0.0
    %339 = vmatpush1.msra.mxu0 %v135
    %340 = vmatprep.subr.mxu0 0.0
    %341 = vmatpush1.msra.mxu0 %v136
    %342 = vmatprep.subr.mxu0 0.0
    %343 = vmatpush1.msra.mxu0 %v137
    %344 = vmatprep.subr.mxu0 0.0
    %345 = vmatpush1.msra.mxu0 %v138
    %346 = vmatprep.subr.mxu0 0.0
    %347 = vmatpush1.msra.mxu0 %v139
    %348 = vmatprep.subr.mxu0 0.0
    %349 = vmatpush1.msra.mxu0 %v140
    %350 = vmatprep.subr.mxu0 0.0
    %351 = vmatpush1.msra.mxu0 %v141
    %352 = vmatprep.subr.mxu0 0.0
    %353 = vmatpush1.msra.mxu0 %v142
    %354 = vmatprep.mubr.f32.mxu0 %v46
    %355 = vmatmul.mubr.f32.gmra.mrb[0].mxu0 %v45
    %v356 = vpop.f32.mrb[0].mxu0
    %v357 = vadd.f32 %v287, %v356
    %v358 = vpop.f32.mrb[0].mxu0
    %359 = vdwg.mxu0
    %360 = vst [vmem:[#allocation7] sm:$0xff] %v357
    // Predicated region
    $region22: #{tpu_custom_call.1} parent=1 // pred_check
      _
    $region23: #{tpu_custom_call.1} parent=1 // pred_check_branch
      %362 = sbr.rel (0) target = $region25
    $region24: #{tpu_custom_call.1} parent=1 // pred_region
      %s364 = ssub.s32 128, 128
      %365 = vsyncadd [#allocation4], %s364
      %s367 = sshll.u32 [#allocation7], 4
      %s368 = int_to_ptr.vmem [resolvable:$true] %s367
      %370 = dma.vmem_to_hbm [thread:$0]  %s368, 128, %s3, [#allocation4]
    $region25: #{tpu_custom_call.1} parent=1 // pred_fallthru
      _
    // Predicated region
    $region26: #{tpu_custom_call.1} parent=1 // pred_check
      _
    $region27: #{tpu_custom_call.1} parent=1 // pred_check_branch
      %372 = sbr.rel (0) target = $region29
    $region28: #{tpu_custom_call.1} parent=1 // pred_region
      %373 = dma.done [#allocation4], 128
    $region29: #{tpu_custom_call.1} parent=1 // pred_fallthru
      _
    %374 = vsyncpa [#allocation3], 1
    %375 = vsyncpa [#allocation6], 1
    %376 = vsyncpa [#allocation4], 1

</llo_original>
